<compile_context>
chip_gen: v7x
topology: tpu7x:2x2x1
jax: 0.10.0
libtpu: 0.0.40
codegen_flags: <defaults>
</compile_context>

<pallas_src>
import jax
import jax.numpy as jnp
from jax import lax
from jax.experimental import pallas as pl
from jax.experimental.pallas import tpu as pltpu

HIDDEN = 256      # shared_fc output width (nn.Linear(input_dim, 256))
HEAD_ROWS = 8     # fused-head output rows, padded to the f32 sublane count


def _round_up(x, m):
    return (x + m - 1) // m * m


# ----------------------------------------------------------------------------
# kernel
# ----------------------------------------------------------------------------
def multitask_kernel(x_ref, w1_ref, b1_ref, wh_ref, bh_ref, out_ref):
    # trunk: h = relu(x @ W1 + b1); bf16 MXU inputs, f32 accumulation/VPU.
    x_bf = x_ref[...].astype(jnp.bfloat16)                      # cast in VMEM
    h = jnp.dot(x_bf, w1_ref[...], preferred_element_type=jnp.float32)
    h = jnp.maximum(h + b1_ref[...], 0.0)
    # fused heads, transposed: y_t[o, b] = sum_k wh[o, k] * h[b, k]
    y_t = lax.dot_general(wh_ref[...], h.astype(jnp.bfloat16),
                          (((1,), (1,)), ((), ())),
                          preferred_element_type=jnp.float32)   # [8, tile_b]
    out_ref[...] = (y_t + bh_ref[...]).astype(out_ref.dtype)


# ----------------------------------------------------------------------------
# wrapper-side (one-time) parameter fusion / layout plumbing
# ----------------------------------------------------------------------------
def prepare_params(params):
    """Fuse the two heads into one transposed [8, hidden] weight; cast to bf16.

    Call once per parameter update; the result is reused across forward calls.
    """
    w1, b1, w2, b2, w3, b3 = params
    hidden = w1.shape[1]
    C, R = w2.shape[1], w3.shape[1]
    assert C + R <= HEAD_ROWS

    wh_t = (jnp.zeros((HEAD_ROWS, hidden), jnp.float32)
            .at[:C, :].set(w2.T)
            .at[C:C + R, :].set(w3.T))
    bh = (jnp.zeros((HEAD_ROWS, 1), jnp.float32)
          .at[:C, 0].set(b2.reshape(-1))
          .at[C:C + R, 0].set(b3.reshape(-1)))

    return {
        "w1_bf": w1.astype(jnp.bfloat16),
        "b1": b1.reshape(1, hidden).astype(jnp.float32),
        "wh_t_bf": wh_t.astype(jnp.bfloat16),
        "bh": bh,
        "hidden": hidden,
        "num_classes": C,
        "risk_dim": R,
    }


def _pick_tiling(B, tile_b_max, input_dim):
    """Choose (tile_b, padded_B).

    tile_b is a multiple of 8 (single tile) or 128 (multi-tile), divides the
    padded batch exactly, fits v5e's 16 MiB scoped-VMEM default, and gives
    >= 2 grid steps when there's enough work (v7x megacore).
    """
    # keep the double-buffered f32 x tile <= ~8 MiB (v5e scoped default 16 MiB)
    vmem_cap = max(128, (8 * 1024 * 1024) // (2 * 4 * max(input_dim, 1)))
    tile_b_max = max(128, (min(tile_b_max, vmem_cap) // 128) * 128)

    if B <= 256:                       # too little work to split across TCs
        tb = _round_up(B, 8)
        return tb, tb

    Bp = _round_up(B, 128)             # lane-dense transposed output tiles
    n = Bp // 128
    want = min(tile_b_max // 128, n)
    if n >= 2:
        want = min(want, n // 2)       # at least 2 tiles for v7x's 2nd core
    want = max(want, 1)
    d = want
    while n % d:                       # largest divisor of n <= want
        d -= 1                         # (tile divides Bp: no extra padding)
    return d * 128, Bp


def multitask_head(x, prepared, *, tile_b=1024):
    """x: [B, input_dim] float32. Returns (class_logits [B, C], risk [B, R])."""
    B, input_dim = x.shape
    hidden = prepared["hidden"]
    C, R = prepared["num_classes"], prepared["risk_dim"]

    tb, Bp = _pick_tiling(B, tile_b, input_dim)
    if Bp != B:
        x = jnp.pad(x, ((0, Bp - B), (0, 0)))   # only when B isn't tile-aligned
    grid = (Bp // tb,)

    resident = lambda shape: pl.BlockSpec(shape, lambda i: (0, 0))

    out = pl.pallas_call(
        multitask_kernel,
        out_shape=jax.ShapeDtypeStruct((HEAD_ROWS, Bp), jnp.float32),
        grid=grid,
        in_specs=[
            pl.BlockSpec((tb, input_dim), lambda i: (i, 0)),  # x: batch-tiled
            resident((input_dim, hidden)),                    # W1 (resident)
            resident((1, hidden)),                            # b1 (resident)
            resident((HEAD_ROWS, hidden)),                    # fused head W^T
            resident((HEAD_ROWS, 1)),                         # fused head bias
        ],
        out_specs=pl.BlockSpec((HEAD_ROWS, tb), lambda i: (0, i)),
        compiler_params=pltpu.CompilerParams(
            dimension_semantics=("parallel",),   # shard batch tiles across TCs
        ),
    )(x, prepared["w1_bf"], prepared["b1"], prepared["wh_t_bf"], prepared["bh"])

    cls = out[:C, :B].T                # tiny transposes of the [8, B] slab
    risk = out[C:C + R, :B].T
    return cls, risk


# ----------------------------------------------------------------------------
# params / references
# ----------------------------------------------------------------------------
def init_params(key, input_dim, hidden=HIDDEN, num_classes=3, risk_output_dim=1):
    ks = jax.random.split(key, 6)
    w1 = jax.random.normal(ks[0], (input_dim, hidden), jnp.float32) * 0.05
    b1 = jax.random.normal(ks[1], (1, hidden), jnp.float32) * 0.05
    w2 = jax.random.normal(ks[2], (hidden, num_classes), jnp.float32) * 0.05
    b2 = jax.random.normal(ks[3], (1, num_classes), jnp.float32) * 0.05
    w3 = jax.random.normal(ks[4], (hidden, risk_output_dim), jnp.float32) * 0.05
    b3 = jax.random.normal(ks[5], (1, risk_output_dim), jnp.float32) * 0.05
    return (w1, b1, w2, b2, w3, b3)


def reference_f32(x, params):
    w1, b1, w2, b2, w3, b3 = params
    h = jax.nn.relu(x @ w1 + b1)
    return h @ w2 + b2, h @ w3 + b3


def reference_bf16(x, params):
    # mirrors kernel numerics: bf16 matmul inputs, f32 accumulation/bias/ReLU
    w1, b1, w2, b2, w3, b3 = params
    xb = x.astype(jnp.bfloat16)
    h = jnp.dot(xb, w1.astype(jnp.bfloat16), preferred_element_type=jnp.float32) + b1
    h = jnp.maximum(h, 0.0).astype(jnp.bfloat16)
    cls = jnp.dot(h, w2.astype(jnp.bfloat16), preferred_element_type=jnp.float32) + b2
    risk = jnp.dot(h, w3.astype(jnp.bfloat16), preferred_element_type=jnp.float32) + b3
    return cls, risk


if __name__ == "__main__":
    key = jax.random.PRNGKey(0)
    k_x, k_x2, k_p = jax.random.split(key, 3)

    input_dim = 32
    params = init_params(k_p, input_dim, hidden=HIDDEN, num_classes=3,
                         risk_output_dim=1)
    prepared = prepare_params(params)   # fused/cast once, reused across calls

    # --- small single-tile path -------------------------------------------
    B = 8
    x = jax.random.normal(k_x, (B, input_dim), jnp.float32)
    cls_logits, risk = multitask_head(x, prepared)
    jax.block_until_ready((cls_logits, risk))
    assert cls_logits.shape == (B, 3) and risk.shape == (B, 1)

    ref_cls_b, ref_risk_b = reference_bf16(x, params)
    assert jnp.allclose(cls_logits, ref_cls_b, atol=2e-3, rtol=2e-3)
    assert jnp.allclose(risk, ref_risk_b, atol=2e-3, rtol=2e-3)

    ref_cls, ref_risk = reference_f32(x, params)
    assert jnp.allclose(cls_logits, ref_cls, atol=3e-2, rtol=3e-2)
    assert jnp.allclose(risk, ref_risk, atol=3e-2, rtol=3e-2)

    # --- multi-tile path (non-aligned batch, exercises grid > 1 + padding) --
    B2 = 300
    x2 = jax.random.normal(k_x2, (B2, input_dim), jnp.float32)
    cls2, risk2 = multitask_head(x2, prepared)
    jax.block_until_ready((cls2, risk2))
    assert cls2.shape == (B2, 3) and risk2.shape == (B2, 1)
    ref_cls2, ref_risk2 = reference_bf16(x2, params)
    assert jnp.allclose(cls2, ref_cls2, atol=2e-3, rtol=2e-3)
    assert jnp.allclose(risk2, ref_risk2, atol=2e-3, rtol=2e-3)

    print("KERNEL_OK")
</pallas_src>

<mosaic_0001>
module attributes {stable_mosaic.version = 11 : i64} {
  func.func @multitask_kernel(%arg0: i32, %arg1: memref<8x32xf32, #tpu.memory_space<vmem>>, %arg2: memref<32x256xbf16, #tpu.memory_space<vmem>>, %arg3: memref<1x256xf32, #tpu.memory_space<vmem>>, %arg4: memref<8x256xbf16, #tpu.memory_space<vmem>>, %arg5: memref<8x1xf32, #tpu.memory_space<vmem>>, %arg6: memref<8x8xf32, #tpu.memory_space<vmem>>) attributes {dimension_semantics = [#tpu.dimension_semantics<parallel>], iteration_bounds = array<i64: 1>, scalar_prefetch = 0 : i64, scratch_operands = 0 : i64, tpu.core_type = #tpu.core_type<tc>, window_params = [{transform_indices = @transform_0, window_bounds = array<i64: 8, 32>}, {pipeline_mode = #tpu.pipeline_mode<synchronous>, transform_indices = @transform_1, window_bounds = array<i64: 32, 256>}, {pipeline_mode = #tpu.pipeline_mode<synchronous>, transform_indices = @transform_2, window_bounds = array<i64: 1, 256>}, {pipeline_mode = #tpu.pipeline_mode<synchronous>, transform_indices = @transform_3, window_bounds = array<i64: 8, 256>}, {pipeline_mode = #tpu.pipeline_mode<synchronous>, transform_indices = @transform_4, window_bounds = array<i64: 8, 1>}, {transform_indices = @transform_5, window_bounds = array<i64: 8, 8>}]} {
    %c0 = arith.constant 0 : index
    %c0_0 = arith.constant 0 : index
    %0 = vector.load %arg1[%c0, %c0_0] : memref<8x32xf32, #tpu.memory_space<vmem>>, vector<8x32xf32>
    %1 = arith.truncf %0 : vector<8x32xf32> to vector<8x32xbf16>
    %c0_1 = arith.constant 0 : index
    %c0_2 = arith.constant 0 : index
    %2 = vector.load %arg2[%c0_1, %c0_2] : memref<32x256xbf16, #tpu.memory_space<vmem>>, vector<32x256xbf16>
    %cst = arith.constant dense<0.000000e+00> : vector<8x256xf32>
    %3 = tpu.matmul %1, %2, %cst {dimension_numbers = #tpu.dot_dimension_numbers<[1], [0], [0], [1], [0, 0, 1, 1], [], []>} : vector<8x32xbf16>, vector<32x256xbf16>, vector<8x256xf32> -> vector<8x256xf32>
    %c0_3 = arith.constant 0 : index
    %c0_4 = arith.constant 0 : index
    %4 = vector.load %arg3[%c0_3, %c0_4] : memref<1x256xf32, #tpu.memory_space<vmem>>, vector<1x256xf32>
    %5 = vector.broadcast %4 : vector<1x256xf32> to vector<8x256xf32>
    %6 = arith.addf %3, %5 : vector<8x256xf32>
    %cst_5 = arith.constant 0.000000e+00 : f32
    %7 = vector.broadcast %cst_5 : f32 to vector<8x256xf32>
    %8 = arith.maximumf %6, %7 : vector<8x256xf32>
    %c0_6 = arith.constant 0 : index
    %c0_7 = arith.constant 0 : index
    %9 = vector.load %arg4[%c0_6, %c0_7] : memref<8x256xbf16, #tpu.memory_space<vmem>>, vector<8x256xbf16>
    %10 = arith.truncf %8 : vector<8x256xf32> to vector<8x256xbf16>
    %cst_8 = arith.constant dense<0.000000e+00> : vector<8x8xf32>
    %11 = tpu.matmul %9, %10, %cst_8 {dimension_numbers = #tpu.dot_dimension_numbers<[1], [1], [0], [0], [0, 0, 1, 0], [], []>} : vector<8x256xbf16>, vector<8x256xbf16>, vector<8x8xf32> -> vector<8x8xf32>
    %c0_9 = arith.constant 0 : index
    %c0_10 = arith.constant 0 : index
    %12 = vector.load %arg5[%c0_9, %c0_10] : memref<8x1xf32, #tpu.memory_space<vmem>>, vector<8x1xf32>
    %13 = vector.broadcast %12 : vector<8x1xf32> to vector<8x8xf32>
    %14 = arith.addf %11, %13 : vector<8x8xf32>
    %c0_11 = arith.constant 0 : index
    %c0_12 = arith.constant 0 : index
    %15 = vector.load %arg6[%c0_11, %c0_12] : memref<8x8xf32, #tpu.memory_space<vmem>>, vector<8x8xf32>
    tpu.vector_store %arg6[%c0_11, %c0_12], %14 {strides = array<i32>} : memref<8x8xf32, #tpu.memory_space<vmem>>, vector<8x8xf32>,
    return
  }
  func.func @transform_0(%arg0: i32) -> (i32, i32) {
    %c0_i32 = arith.constant 0 : i32
    %c0_i32_0 = arith.constant 0 : i32
    return %arg0, %c0_i32 : i32, i32
  }
  func.func @transform_1(%arg0: i32) -> (i32, i32) {
    %c0_i32 = arith.constant 0 : i32
    %c0_i32_0 = arith.constant 0 : i32
    %c0_i32_1 = arith.constant 0 : i32
    return %c0_i32, %c0_i32_0 : i32, i32
  }
  func.func @transform_2(%arg0: i32) -> (i32, i32) {
    %c0_i32 = arith.constant 0 : i32
    %c0_i32_0 = arith.constant 0 : i32
    %c0_i32_1 = arith.constant 0 : i32
    return %c0_i32, %c0_i32_0 : i32, i32
  }
  func.func @transform_3(%arg0: i32) -> (i32, i32) {
    %c0_i32 = arith.constant 0 : i32
    %c0_i32_0 = arith.constant 0 : i32
    %c0_i32_1 = arith.constant 0 : i32
    return %c0_i32, %c0_i32_0 : i32, i32
  }
  func.func @transform_4(%arg0: i32) -> (i32, i32) {
    %c0_i32 = arith.constant 0 : i32
    %c0_i32_0 = arith.constant 0 : i32
    %c0_i32_1 = arith.constant 0 : i32
    return %c0_i32, %c0_i32_0 : i32, i32
  }
  func.func @transform_5(%arg0: i32) -> (i32, i32) {
    %c0_i32 = arith.constant 0 : i32
    %c0_i32_0 = arith.constant 0 : i32
    return %c0_i32, %arg0 : i32, i32
  }
}

</mosaic_0001>

<llo_original>
// kernel: tpu_custom_call.1
$region0: #{tpu_custom_call.1}
  #allocation0 [shape = 'u32[]', space=smem, size = 0x4, offset = 0x4, fixed_abs, tag = 'smem constant byte address 0x4 - core index']
  #allocation1 [shape = 'u32[144,128]{1,0:T(1,128)}', space=vmem, size = 0x12000, scoped, tag = 'internal scratch']
  %s0 = inlined_call_operand.vmem [shape: f32[8,32], index: 0, kind: input, shape index: {}]
  %s1 = inlined_call_operand.hbm [shape: bf16[32,256], index: 1, kind: input, shape index: {}]
  %s2 = inlined_call_operand.hbm [shape: f32[1,256], index: 2, kind: input, shape index: {}]
  %s3 = inlined_call_operand.vmem [shape: bf16[8,256], index: 3, kind: input, shape index: {}]
  %s4 = inlined_call_operand.vmem [shape: f32[8,1], index: 4, kind: input, shape index: {}]
  %s5 = inlined_call_operand.hbm [shape: f32[8,8], index: 5, kind: output, shape index: {}]
  %s6 = sld [smem:[#allocation0]]
  $region38: #{tpu_custom_call.1} parent=0
    _
  %s8 = ssub.s32 1, %s6
  %s9 = scalar_select 0, %s8, %s6
  $region1: #{tpu_custom_call.1} parent=0
    #allocation2 [shape = 'u8[16384]{0}', space=vmem, size = 0x4000, scoped, tag = 'input window, operand 1, single buffered']
    #allocation3 [shape = 's32[1]{0}', space=sflag, size = 0x4, scoped, tag = 'scoped memory for tpu_custom_call.1']
    #allocation4 [shape = 's32[1]{0}', space=sflag, size = 0x4, scoped, tag = 'scoped memory for tpu_custom_call.1']
    #allocation5 [shape = 'u8[1024]{0}', space=vmem, size = 0x400, scoped, tag = 'input window, operand 2, single buffered']
    #allocation6 [shape = 's32[1]{0}', space=sflag, size = 0x4, scoped, tag = 'scoped memory for tpu_custom_call.1']
    #allocation7 [shape = 'u8[4096]{0}', space=vmem, size = 0x1000, scoped, tag = 'output window, operand 0, single buffered']
    %10 = vsyncpa [#allocation3], 0
    %11 = vsyncpa [#allocation6], 0
    %12 = vsyncpa [#allocation4], 0
    // Predicated region
    $region2: #{tpu_custom_call.1} parent=1 // pred_check
      _
    $region3: #{tpu_custom_call.1} parent=1 // pred_check_branch
      %14 = sbr.rel (0) target = $region5
    $region4: #{tpu_custom_call.1} parent=1 // pred_region
      _
    $region5: #{tpu_custom_call.1} parent=1 // pred_fallthru
      _
    // Predicated region
    $region6: #{tpu_custom_call.1} parent=1 // pred_check
      _
    $region7: #{tpu_custom_call.1} parent=1 // pred_check_branch
      %16 = sbr.rel (0) target = $region9
    $region8: #{tpu_custom_call.1} parent=1 // pred_region
      %s18 = ssub.s32 512, 512
      %19 = vsyncadd [#allocation3], %s18
      %s20 = sshll.u32 [#allocation2], 4
      %s21 = int_to_ptr.vmem [resolvable:$true] %s20
      %26 = dma.hbm_to_vmem [thread:$0]  %s1, 512, %s21, [#allocation3], 128, 128, 8
    $region9: #{tpu_custom_call.1} parent=1 // pred_fallthru
      _
    // Predicated region
    $region10: #{tpu_custom_call.1} parent=1 // pred_check
      _
    $region11: #{tpu_custom_call.1} parent=1 // pred_check_branch
      %28 = sbr.rel (0) target = $region13
    $region12: #{tpu_custom_call.1} parent=1 // pred_region
      %s30 = ssub.s32 32, 32
      %31 = vsyncadd [#allocation6], %s30
      %s33 = sshll.u32 [#allocation5], 4
      %s34 = int_to_ptr.vmem [resolvable:$true] %s33
      %36 = dma.hbm_to_vmem [thread:$0]  %s2, 32, %s34, [#allocation6]
    $region13: #{tpu_custom_call.1} parent=1 // pred_fallthru
      _
    // Predicated region
    $region14: #{tpu_custom_call.1} parent=1 // pred_check
      _
    $region15: #{tpu_custom_call.1} parent=1 // pred_check_branch
      %38 = sbr.rel (0) target = $region17
    $region16: #{tpu_custom_call.1} parent=1 // pred_region
      _
    $region17: #{tpu_custom_call.1} parent=1 // pred_fallthru
      _
    // Predicated region
    $region18: #{tpu_custom_call.1} parent=1 // pred_check
      _
    $region19: #{tpu_custom_call.1} parent=1 // pred_check_branch
      %40 = sbr.rel (0) target = $region21
    $region20: #{tpu_custom_call.1} parent=1 // pred_region
      _
    $region21: #{tpu_custom_call.1} parent=1 // pred_fallthru
      _
    // Predicated region
    $region22: #{tpu_custom_call.1} parent=1 // pred_check
      _
    $region23: #{tpu_custom_call.1} parent=1 // pred_check_branch
      %42 = sbr.rel (0) target = $region25
    $region24: #{tpu_custom_call.1} parent=1 // pred_region
      %43 = dma.done [#allocation3], 512
    $region25: #{tpu_custom_call.1} parent=1 // pred_fallthru
      _
    // Predicated region
    $region26: #{tpu_custom_call.1} parent=1 // pred_check
      _
    $region27: #{tpu_custom_call.1} parent=1 // pred_check_branch
      %45 = sbr.rel (0) target = $region29
    $region28: #{tpu_custom_call.1} parent=1 // pred_region
      %46 = dma.done [#allocation6], 32
    $region29: #{tpu_custom_call.1} parent=1 // pred_fallthru
      _
    %v48 = vld [vmem:[%s0] sm:$0xff]
    %v49 = vpack.c.bf16 %v48, %v48
    %v50 = vld [vmem:[#allocation2] sm:$0xff]
    %v51 = vld [vmem:[#allocation2 + $0x8] sm:$0xff]
    %v52 = vld [vmem:[#allocation2 + $0x10] sm:$0xff]
    %v53 = vld [vmem:[#allocation2 + $0x18] sm:$0xff]
    %v54 = vld [vmem:[#allocation5] sm:$0x3]
    %v56 = vlaneseq
    %v57 = vshrl.u32 %v56, 7
    %v58 = vsub.s32 0, %v57
    %v59 = vrot.slane %v54, %v58
    %v60 = vlaneseq
    %v61 = vshrl.u32 %v60, 7
    %v62 = vsub.s32 1, %v61
    %v63 = vrot.slane %v54, %v62
    %v70 = vunpack.c.l.b16 %v50
    %v71 = vunpack.c.h.b16 %v50
    %v72 = vunpack.c.l.b16 %v51
    %v73 = vunpack.c.h.b16 %v51
    %v74 = vunpack.c.l.b16 %v52
    %v75 = vunpack.c.h.b16 %v52
    %v76 = vunpack.c.l.b16 %v53
    %v77 = vunpack.c.h.b16 %v53
    %v78 = vpack.c.b16 %v72, %v70
    %v79 = vpack.c.b16 %v73, %v71
    %v80 = vpack.c.b16 %v76, %v74
    %v81 = vpack.c.b16 %v77, %v75
    %vm86 = vcmask 261120
    %v88 = vsel %vm86, %v49, 0
    %90 = vmatprep.subr.bf16.mxu0 %v79
    %91 = vmatpush1.bf16.msra.mxu0 %v78
    %92 = vmatprep.subr.bf16.mxu0 %v81
    %93 = vmatpush1.bf16.msra.mxu0 %v80
    %94 = vmatprep.subr.bf16.mxu0 0
    %95 = vmatpush1.bf16.msra.mxu0 0
    %96 = vmatprep.subr.bf16.mxu0 0
    %97 = vmatpush1.bf16.msra.mxu0 0
    %98 = vmatprep.subr.bf16.mxu0 0
    %99 = vmatpush1.bf16.msra.mxu0 0
    %100 = vmatprep.subr.bf16.mxu0 0
    %101 = vmatpush1.bf16.msra.mxu0 0
    %102 = vmatprep.subr.bf16.mxu0 0
    %103 = vmatpush1.bf16.msra.mxu0 0
    %104 = vmatprep.subr.bf16.mxu0 0
    %105 = vmatpush1.bf16.msra.mxu0 0
    %106 = vmatprep.subr.bf16.mxu0 0
    %107 = vmatpush1.bf16.msra.mxu0 0
    %108 = vmatprep.subr.bf16.mxu0 0
    %109 = vmatpush1.bf16.msra.mxu0 0
    %110 = vmatprep.subr.bf16.mxu0 0
    %111 = vmatpush1.bf16.msra.mxu0 0
    %112 = vmatprep.subr.bf16.mxu0 0
    %113 = vmatpush1.bf16.msra.mxu0 0
    %114 = vmatprep.subr.bf16.mxu0 0
    %115 = vmatpush1.bf16.msra.mxu0 0
    %116 = vmatprep.subr.bf16.mxu0 0
    %117 = vmatpush1.bf16.msra.mxu0 0
    %118 = vmatprep.subr.bf16.mxu0 0
    %119 = vmatpush1.bf16.msra.mxu0 0
    %120 = vmatprep.subr.bf16.mxu0 0
    %121 = vmatpush1.bf16.msra.mxu0 0
    %122 = vmatprep.mubr.bf16.mxu0 0
    %123 = vmatmul.mubr.bf16.gmra.mrb[0].mxu0 %v88
    %v124 = vpop.f32.mrb[0].mxu0
    %v125 = vadd.f32 %v59, %v124
    %v126 = vpop.f32.mrb[0].mxu0
    %v127 = vadd.f32 %v63, %v126
    %v128 = vpop.f32.mrb[0].mxu0
    %v129 = vpop.f32.mrb[0].mxu0
    %130 = vdwg.mxu0
    %v131 = vmax.f32 %v125, 0.0
    %v132 = vmax.f32 %v127, 0.0
    %v133 = vld [vmem:[%s3] sm:$0xff]
    %v134 = vpack.c.bf16 %v131, %v131
    %v135 = vpack.c.bf16 %v132, %v132
    %v136 = vld [vmem:[%s4] sm:$0xff]
    %138 = vset.pattern.permute.xlu0 0
    %139 = vperm.xlu0 %138, %v136
    %v140 = vpop.permute.xlu0 %139
    %v143 = vunpack.c.l.b16 %v133
    %v144 = vunpack.c.h.b16 %v133
    %v145 = vpack.c.b16 %v143, %v143
    %v146 = vpack.c.b16 %v144, %v144
    %149 = vmatprep.subr.bf16.mxu0 %v135
    %150 = vmatpush1.bf16.xpose.msra.mxu0 %v134
    %151 = vmatprep.subr.bf16.mxu0 0
    %152 = vmatpush1.bf16.xpose.msra.mxu0 0
    %153 = vmatprep.subr.bf16.mxu0 0
    %154 = vmatpush1.bf16.xpose.msra.mxu0 0
    %155 = vmatprep.subr.bf16.mxu0 0
    %156 = vmatpush1.bf16.xpose.msra.mxu0 0
    %157 = vmatprep.subr.bf16.mxu0 0
    %158 = vmatpush1.bf16.xpose.msra.mxu0 0
    %159 = vmatprep.subr.bf16.mxu0 0
    %160 = vmatpush1.bf16.xpose.msra.mxu0 0
    %161 = vmatprep.subr.bf16.mxu0 0
    %162 = vmatpush1.bf16.xpose.msra.mxu0 0
    %163 = vmatprep.subr.bf16.mxu0 0
    %164 = vmatpush1.bf16.xpose.msra.mxu0 0
    %165 = vmatprep.subr.bf16.mxu0 0
    %166 = vmatpush1.bf16.xpose.msra.mxu0 0
    %167 = vmatprep.subr.bf16.mxu0 0
    %168 = vmatpush1.bf16.xpose.msra.mxu0 0
    %169 = vmatprep.subr.bf16.mxu0 0
    %170 = vmatpush1.bf16.xpose.msra.mxu0 0
    %171 = vmatprep.subr.bf16.mxu0 0
    %172 = vmatpush1.bf16.xpose.msra.mxu0 0
    %173 = vmatprep.subr.bf16.mxu0 0
    %174 = vmatpush1.bf16.xpose.msra.mxu0 0
    %175 = vmatprep.subr.bf16.mxu0 0
    %176 = vmatpush1.bf16.xpose.msra.mxu0 0
    %177 = vmatprep.subr.bf16.mxu0 0
    %178 = vmatpush1.bf16.xpose.msra.mxu0 0
    %179 = vmatprep.subr.bf16.mxu0 0
    %180 = vmatpush1.bf16.xpose.msra.mxu0 0
    %181 = vmatprep.mubr.bf16.mxu0 %v146
    %182 = vmatmul.mubr.bf16.gmra.mrb[0].mxu0 %v145
    %v183 = vpop.f32.mrb[0].mxu0
    %v184 = vadd.f32 %v140, %v183
    %v185 = vpop.f32.mrb[0].mxu0
    %v186 = vpop.f32.mrb[0].mxu0
    %v187 = vpop.f32.mrb[0].mxu0
    %188 = vdwg.mxu0
    %vm189 = vcmask 64512
    %190 = vst.msk [vmem:[#allocation7] sm:$0xff] %vm189, %v184
    // Predicated region
    $region30: #{tpu_custom_call.1} parent=1 // pred_check
      _
    $region31: #{tpu_custom_call.1} parent=1 // pred_check_branch
      %192 = sbr.rel (0) target = $region33
    $region32: #{tpu_custom_call.1} parent=1 // pred_region
      %s194 = ssub.s32 128, 128
      %195 = vsyncadd [#allocation4], %s194
      %s197 = sshll.u32 [#allocation7], 4
      %s198 = int_to_ptr.vmem [resolvable:$true] %s197
      %200 = dma.vmem_to_hbm [thread:$0]  %s198, 128, %s5, [#allocation4]
    $region33: #{tpu_custom_call.1} parent=1 // pred_fallthru
      _
    // Predicated region
    $region34: #{tpu_custom_call.1} parent=1 // pred_check
      _
    $region35: #{tpu_custom_call.1} parent=1 // pred_check_branch
      %202 = sbr.rel (0) target = $region37
    $region36: #{tpu_custom_call.1} parent=1 // pred_region
      %203 = dma.done [#allocation4], 128
    $region37: #{tpu_custom_call.1} parent=1 // pred_fallthru
      _
    %204 = vsyncpa [#allocation3], 1
    %205 = vsyncpa [#allocation6], 1
    %206 = vsyncpa [#allocation4], 1

</llo_original>
